<compile_context>
chip_gen: v6e
topology: v6e:2x2x1
jax: 0.10.0
libtpu: 0.0.40
codegen_flags: <defaults>
</compile_context>

<pallas_src>
import functools
import math

import jax
import jax.numpy as jnp
from jax import lax
from jax.experimental import pallas as pl
from jax.experimental.pallas import tpu as pltpu

_LANE = 128      # lane tile (last dim)
_SUBLANE = 8     # f32 sublane tile (second-to-last dim)
_KV_TILE_MAX = 512


def _round_up(x, m):
    return ((x + m - 1) // m) * m


def _device_kind():
    try:
        return jax.devices()[0].device_kind.lower()
    except Exception:
        return ""


def _num_tensorcores():
    """TensorCores a 'parallel' grid axis can be sharded across on one device."""
    kind = _device_kind()
    if any(s in kind for s in ("v5 lite", "v5e", "v6", "v2", "v3")):
        return 1
    if any(s in kind for s in ("7", "v4", "v5p")):
        return 2
    return 1


def _vmem_ceiling_bytes():
    kind = _device_kind()
    if "7" in kind:                      # v7x: 64 MiB physical per TensorCore
        return 48 * 1024 * 1024
    if any(s in kind for s in ("v2", "v3")):
        return 12 * 1024 * 1024          # 16 MiB physical
    return 96 * 1024 * 1024              # v4/v5e/v5p/v6e: 128 MiB physical


def _step_vmem_bytes(bt, s, d, kv_tile, mm_bytes):
    """Rough per-grid-step VMEM footprint (bytes)."""
    act = bt * s * d                     # one (bt, S, D) activation slab (elements)
    b = 0
    b += 2 * act * 4 * 2                 # x-in + out blocks, f32, double-buffered
    b += act * 4                         # LayerNorm output
    b += 3 * act * 4                     # qkv (f32 accumulate)
    b += 3 * act * mm_bytes              # q/k/v in matmul dtype
    b += bt * s * kv_tile * 4            # score tile (f32)
    b += bt * s * kv_tile * mm_bytes     # prob tile (matmul dtype)
    b += 2 * act * 4                     # attention accumulator + out-proj input
    b += 4 * bt * s * 4                  # m / l / alpha rows
    b += (3 * d * d + d * d) * mm_bytes  # fused QKV + out-proj weights (single-buffered)
    b += 16 * d * 4                      # gamma/beta/biases
    return b


def _pick_grid_steps(B, s_pad, d_pad, kv_tile, budget, n_cores, mm_bytes):
    divisors = [n for n in range(1, B + 1) if B % n == 0]
    core_aligned = [n for n in divisors if n % n_cores == 0] or divisors
    fitting = [n for n in core_aligned
               if _step_vmem_bytes(B // n, s_pad, d_pad, kv_tile, mm_bytes) <= budget]
    if not fitting:
        return B
    # Prefer enough steps that the per-step x block (<= ~8 MiB) can pipeline behind
    # compute, but otherwise as few steps as possible (tall GEMM M, and on single-TC
    # chips extra steps are pure serial overhead).
    pipelined = [n for n in fitting
                 if (B // n) * s_pad * d_pad * 4 <= 8 * 1024 * 1024]
    return min(pipelined) if pipelined else min(fitting)


def _const_block_spec(shape):
    """Full-array block, same index every step; single-buffered when supported."""
    index_map = lambda i: (0,) * len(shape)
    try:
        return pl.BlockSpec(shape, index_map, pipeline_mode=pl.Buffered(1))
    except TypeError:                      # older JAX without pipeline_mode kwarg
        return pl.BlockSpec(shape, index_map)


def _mhsa_kernel(x_ref, gamma_ref, beta_ref,
                 wqkv_ref, bqkv_ref,
                 wout_ref, bout_ref,
                 o_ref, *, d_real, s_real, kv_tile, matmul_dtype):
    bt, s_pad, d_pad = x_ref.shape
    x = x_ref[...].astype(jnp.float32)                        # (Bt, S, D) f32

    # ---- LayerNorm over the REAL feature width (eps=1e-5, biased var), f32 ----
    inv_d = jnp.float32(1.0 / d_real)
    mean = jnp.sum(x, axis=-1, keepdims=True) * inv_d         # pad cols are zero
    diff = x - mean
    if d_pad != d_real:                                        # mask padded feature cols
        feat = lax.broadcasted_iota(jnp.int32, (1, 1, d_pad), 2)
        diff = jnp.where(feat < d_real, diff, 0.0)
    var = jnp.sum(diff * diff, axis=-1, keepdims=True) * inv_d
    xn = diff * lax.rsqrt(var + 1e-5)
    xn = xn * gamma_ref[...] + beta_ref[...]                   # padded gamma/beta = 0

    # ---- fused Q/K/V projection: one (Bt*S, D) @ (D, 3D) GEMM, f32 accumulate ----
    xm = xn.reshape(bt * s_pad, d_pad).astype(matmul_dtype)
    qkv = jnp.dot(xm, wqkv_ref[...],
                  preferred_element_type=jnp.float32) + bqkv_ref[...]
    # D padded to a 128 multiple -> these column slices are lane-tile aligned.
    q = qkv[:, 0 * d_pad:1 * d_pad].reshape(bt, s_pad, d_pad).astype(matmul_dtype)
    k = qkv[:, 1 * d_pad:2 * d_pad].reshape(bt, s_pad, d_pad).astype(matmul_dtype)
    v = qkv[:, 2 * d_pad:3 * d_pad].reshape(bt, s_pad, d_pad).astype(matmul_dtype)

    # ---- single-head attention, online softmax over static K/V tiles ----
    neg = jnp.float32(-1e30)
    m_i = jnp.full((bt, s_pad, 1), neg, jnp.float32)
    l_i = jnp.zeros((bt, s_pad, 1), jnp.float32)
    acc = jnp.zeros((bt, s_pad, d_pad), jnp.float32)
    for start in range(0, s_pad, kv_tile):
        size = min(kv_tile, s_pad - start)
        k_t = lax.slice_in_dim(k, start, start + size, axis=1)
        v_t = lax.slice_in_dim(v, start, start + size, axis=1)
        s_t = jnp.einsum("bqd,bkd->bqk", q, k_t,
                         preferred_element_type=jnp.float32)   # (Bt, S, size)
        if start + size > s_real:                              # mask padded key rows
            key_ids = start + lax.broadcasted_iota(jnp.int32, (1, 1, size), 2)
            s_t = jnp.where(key_ids < s_real, s_t, neg)
        m_new = jnp.maximum(m_i, jnp.max(s_t, axis=-1, keepdims=True))
        alpha = jnp.exp(m_i - m_new)
        p = jnp.exp(s_t - m_new)                               # f32 (EUP)
        l_i = alpha * l_i + jnp.sum(p, axis=-1, keepdims=True)
        acc = alpha * acc + jnp.einsum("bqk,bkd->bqd", p.astype(matmul_dtype), v_t,
                                       preferred_element_type=jnp.float32)
        m_i = m_new
    attn = acc * pl.reciprocal(l_i, approx=True)               # single EUP divide

    # ---- out_proj (dropout = identity in eval mode) ----
    out = jnp.dot(attn.reshape(bt * s_pad, d_pad).astype(matmul_dtype), wout_ref[...],
                  preferred_element_type=jnp.float32) + bout_ref[...]
    o_ref[...] = out.reshape(bt, s_pad, d_pad).astype(o_ref.dtype)


@functools.partial(jax.jit, static_argnames=("matmul_dtype",))
def mhsa_forward(x_sbd, params, matmul_dtype=jnp.bfloat16):
    """x_sbd: (S, B, D) float32, matching PyTorch seq-first convention."""
    S, B, D = x_sbd.shape
    f32 = jnp.float32

    # ---- hardware-aware tiling decisions (all static Python) ----
    d_pad = _round_up(D, _LANE)
    s_pad = _round_up(S, _SUBLANE)
    kv_tile = s_pad if s_pad <= _KV_TILE_MAX else _KV_TILE_MAX
    mm_bytes = jnp.dtype(matmul_dtype).itemsize
    n_cores = _num_tensorcores()
    ceiling = _vmem_ceiling_bytes()
    n_steps = _pick_grid_steps(B, s_pad, d_pad, kv_tile, ceiling, n_cores, mm_bytes)
    bt = B // n_steps
    est = _step_vmem_bytes(bt, s_pad, d_pad, kv_tile, mm_bytes)
    vmem_limit = int(min(ceiling, max(32 * 1024 * 1024, (est * 3) // 2)))

    # ---- layout prep: (S,B,D) -> (B,S,D), zero-pad to tile-aligned (s_pad, d_pad) ----
    # (the transpose and the pad fuse into one XLA copy)
    x_bsd = jnp.transpose(x_sbd, (1, 0, 2))
    if (s_pad, d_pad) != (S, D):
        x_bsd = jnp.pad(x_bsd, ((0, 0), (0, s_pad - S), (0, d_pad - D)))

    # ---- fuse outer Linear with MHA in_proj (exact) and fold attention scale ----
    scale = 1.0 / math.sqrt(D)

    def fuse(w_outer, b_outer, w_in, b_in, s=1.0):
        w = (w_outer.T @ w_in.T) * s
        b = (b_outer @ w_in.T + b_in) * s
        return w, b

    wq, bq = fuse(params["wq"], params["bq"], params["w_in_q"], params["b_in_q"], scale)
    wk, bk = fuse(params["wk"], params["bk"], params["w_in_k"], params["b_in_k"])
    wv, bv = fuse(params["wv"], params["bv"], params["w_in_v"], params["b_in_v"])

    def padw(w):   # (D, D) -> (d_pad, d_pad), zero-padded
        return jnp.pad(w, ((0, d_pad - D), (0, d_pad - D)))

    def padb(b):   # (D,) -> (d_pad,), zero-padded
        return jnp.pad(b, (0, d_pad - D))

    wqkv = jnp.concatenate([padw(wq), padw(wk), padw(wv)], axis=1).astype(matmul_dtype)
    bqkv = jnp.concatenate([padb(bq), padb(bk), padb(bv)]).reshape(1, 3 * d_pad).astype(f32)
    wout = padw(params["w_out"].T).astype(matmul_dtype)
    bout = padb(params["b_out"]).reshape(1, d_pad).astype(f32)
    gamma = padb(params["ln_gamma"]).reshape(1, d_pad).astype(f32)
    beta = padb(params["ln_beta"]).reshape(1, d_pad).astype(f32)

    out_padded = pl.pallas_call(
        functools.partial(_mhsa_kernel, d_real=D, s_real=S, kv_tile=kv_tile,
                          matmul_dtype=matmul_dtype),
        out_shape=jax.ShapeDtypeStruct((B, s_pad, d_pad), x_sbd.dtype),
        grid_spec=pltpu.PrefetchScalarGridSpec(
            num_scalar_prefetch=0,
            grid=(n_steps,),
            in_specs=[
                pl.BlockSpec((bt, s_pad, d_pad), lambda i: (i, 0, 0)),  # x (batch-blocked)
                _const_block_spec((1, d_pad)),            # LN gamma
                _const_block_spec((1, d_pad)),            # LN beta
                _const_block_spec((d_pad, 3 * d_pad)),    # fused QKV weight
                _const_block_spec((1, 3 * d_pad)),        # fused QKV bias
                _const_block_spec((d_pad, d_pad)),        # out_proj weight
                _const_block_spec((1, d_pad)),            # out_proj bias
            ],
            out_specs=pl.BlockSpec((bt, s_pad, d_pad), lambda i: (i, 0, 0)),
        ),
        compiler_params=pltpu.CompilerParams(
            dimension_semantics=("parallel",),
            vmem_limit_bytes=vmem_limit,
        ),
    )(x_bsd, gamma, beta, wqkv, bqkv, wout, bout)

    out = out_padded[:, :S, :D]
    return jnp.transpose(out, (1, 0, 2))                  # back to (S, B, D)


def _reference(x_sbd, params):
    """Pure-JAX reference mirroring the PyTorch forward (eval mode), unfused, f32."""
    D = x_sbd.shape[-1]
    mean = jnp.mean(x_sbd, axis=-1, keepdims=True)
    var = jnp.mean((x_sbd - mean) ** 2, axis=-1, keepdims=True)
    xn = (x_sbd - mean) / jnp.sqrt(var + 1e-5)
    xn = xn * params["ln_gamma"] + params["ln_beta"]
    q = xn @ params["wq"].T + params["bq"]
    k = xn @ params["wk"].T + params["bk"]
    v = xn @ params["wv"].T + params["bv"]
    q2 = q @ params["w_in_q"].T + params["b_in_q"]
    k2 = k @ params["w_in_k"].T + params["b_in_k"]
    v2 = v @ params["w_in_v"].T + params["b_in_v"]
    scale = 1.0 / math.sqrt(D)
    scores = jnp.einsum("qbd,kbd->bqk", q2 * scale, k2)
    probs = jax.nn.softmax(scores, axis=-1)
    attn = jnp.einsum("bqk,kbd->qbd", probs, v2)
    return attn @ params["w_out"].T + params["b_out"]


def _init_params(key, D):
    ks = jax.random.split(key, 10)
    std = 1.0 / math.sqrt(D)
    u = lambda k, shp: jax.random.uniform(k, shp, jnp.float32, -std, std)
    return {
        "ln_gamma": jnp.ones((D,), jnp.float32),
        "ln_beta": jnp.zeros((D,), jnp.float32),
        "wq": u(ks[0], (D, D)), "bq": u(ks[1], (D,)),
        "wk": u(ks[2], (D, D)), "bk": u(ks[3], (D,)),
        "wv": u(ks[4], (D, D)), "bv": u(ks[5], (D,)),
        "w_in_q": u(ks[6], (D, D)), "b_in_q": jnp.zeros((D,), jnp.float32),
        "w_in_k": u(ks[7], (D, D)), "b_in_k": jnp.zeros((D,), jnp.float32),
        "w_in_v": u(ks[8], (D, D)), "b_in_v": jnp.zeros((D,), jnp.float32),
        "w_out": u(ks[9], (D, D)), "b_out": jnp.zeros((D,), jnp.float32),
    }


if __name__ == "__main__":
    S, B, D = 8, 2, 32
    key = jax.random.PRNGKey(0)
    kx, kp = jax.random.split(key)
    x = jax.random.normal(kx, (S, B, D), jnp.float32)   # (seq, batch, dim), PyTorch convention
    params = _init_params(kp, D)

    ref = _reference(x, params)

    # f32 matmul path: validates fused-weight algebra + padding/masking + online softmax.
    out_f32 = jax.block_until_ready(mhsa_forward(x, params, matmul_dtype=jnp.float32))
    assert out_f32.shape == (S, B, D)
    err_f32 = float(jnp.max(jnp.abs(out_f32 - ref)))
    assert jnp.allclose(out_f32, ref, rtol=2e-3, atol=2e-3), err_f32

    # bf16 matmul path (default fast path): bf16 MXU inputs, f32 accumulation.
    out_bf16 = jax.block_until_ready(mhsa_forward(x, params))
    err_bf16 = float(jnp.max(jnp.abs(out_bf16 - ref)))
    assert jnp.allclose(out_bf16, ref, rtol=5e-2, atol=5e-2), err_bf16

    print("KERNEL_OK")
</pallas_src>

<mosaic_0001>
module attributes {stable_mosaic.version = 11 : i64} {
  func.func @_mhsa_kernel(%arg0: i32, %arg1: memref<2x8x128xf32, #tpu.memory_space<vmem>>, %arg2: memref<1x128xf32, #tpu.memory_space<vmem>>, %arg3: memref<1x128xf32, #tpu.memory_space<vmem>>, %arg4: memref<128x384xf32, #tpu.memory_space<vmem>>, %arg5: memref<1x384xf32, #tpu.memory_space<vmem>>, %arg6: memref<128x128xf32, #tpu.memory_space<vmem>>, %arg7: memref<1x128xf32, #tpu.memory_space<vmem>>, %arg8: memref<2x8x128xf32, #tpu.memory_space<vmem>>) attributes {dimension_semantics = [#tpu.dimension_semantics<parallel>], iteration_bounds = array<i64: 1>, scalar_prefetch = 0 : i64, scratch_operands = 0 : i64, tpu.core_type = #tpu.core_type<tc>, window_params = [{transform_indices = @transform_0, window_bounds = array<i64: 2, 8, 128>}, {pipeline_mode = #tpu.pipeline_mode<synchronous>, transform_indices = @transform_1, window_bounds = array<i64: 1, 128>}, {pipeline_mode = #tpu.pipeline_mode<synchronous>, transform_indices = @transform_2, window_bounds = array<i64: 1, 128>}, {pipeline_mode = #tpu.pipeline_mode<synchronous>, transform_indices = @transform_3, window_bounds = array<i64: 128, 384>}, {pipeline_mode = #tpu.pipeline_mode<synchronous>, transform_indices = @transform_4, window_bounds = array<i64: 1, 384>}, {pipeline_mode = #tpu.pipeline_mode<synchronous>, transform_indices = @transform_5, window_bounds = array<i64: 128, 128>}, {pipeline_mode = #tpu.pipeline_mode<synchronous>, transform_indices = @transform_6, window_bounds = array<i64: 1, 128>}, {transform_indices = @transform_7, window_bounds = array<i64: 2, 8, 128>}]} {
    %c0 = arith.constant 0 : index
    %c0_0 = arith.constant 0 : index
    %c0_1 = arith.constant 0 : index
    %0 = vector.load %arg1[%c0, %c0_0, %c0_1] : memref<2x8x128xf32, #tpu.memory_space<vmem>>, vector<2x8x128xf32>
    %cst = arith.constant dense<0.000000e+00> : vector<2x8xf32>
    %1 = vector.multi_reduction <add>, %0, %cst [2] : vector<2x8x128xf32> to vector<2x8xf32>
    %2 = vector.shape_cast %1 : vector<2x8xf32> to vector<2x8x1xf32>
    %cst_2 = arith.constant 3.125000e-02 : f32
    %3 = vector.broadcast %cst_2 : f32 to vector<2x8x1xf32>
    %4 = arith.mulf %2, %3 : vector<2x8x1xf32>
    %5 = vector.broadcast %4 : vector<2x8x1xf32> to vector<2x8x128xf32>
    %6 = arith.subf %0, %5 : vector<2x8x128xf32>
    %7 = tpu.iota {dimensions = array<i32: 2>} : vector<1x1x128xi32>
    %c32_i32 = arith.constant 32 : i32
    %8 = vector.broadcast %c32_i32 : i32 to vector<1x1x128xi32>
    %9 = arith.cmpi slt, %7, %8 : vector<1x1x128xi32>
    %cst_3 = arith.constant 0.000000e+00 : f32
    %10 = vector.shape_cast %9 : vector<1x1x128xi1> to vector<1x1x128xi1>
    %11 = vector.broadcast %10 : vector<1x1x128xi1> to vector<2x8x128xi1>
    %12 = vector.broadcast %cst_3 : f32 to vector<2x8x128xf32>
    %13 = arith.select %11, %6, %12 : vector<2x8x128xi1>, vector<2x8x128xf32>
    %14 = arith.mulf %13, %13 : vector<2x8x128xf32>
    %cst_4 = arith.constant dense<0.000000e+00> : vector<2x8xf32>
    %15 = vector.multi_reduction <add>, %14, %cst_4 [2] : vector<2x8x128xf32> to vector<2x8xf32>
    %16 = vector.shape_cast %15 : vector<2x8xf32> to vector<2x8x1xf32>
    %cst_5 = arith.constant 3.125000e-02 : f32
    %17 = vector.broadcast %cst_5 : f32 to vector<2x8x1xf32>
    %18 = arith.mulf %16, %17 : vector<2x8x1xf32>
    %cst_6 = arith.constant 9.99999974E-6 : f32
    %19 = vector.broadcast %cst_6 : f32 to vector<2x8x1xf32>
    %20 = arith.addf %18, %19 : vector<2x8x1xf32>
    %21 = math.rsqrt %20 : vector<2x8x1xf32>
    %22 = vector.broadcast %21 : vector<2x8x1xf32> to vector<2x8x128xf32>
    %23 = arith.mulf %13, %22 : vector<2x8x128xf32>
    %c0_7 = arith.constant 0 : index
    %c0_8 = arith.constant 0 : index
    %24 = vector.load %arg2[%c0_7, %c0_8] : memref<1x128xf32, #tpu.memory_space<vmem>>, vector<1x128xf32>
    %25 = vector.shape_cast %24 : vector<1x128xf32> to vector<1x1x128xf32>
    %26 = vector.broadcast %25 : vector<1x1x128xf32> to vector<2x8x128xf32>
    %27 = arith.mulf %23, %26 : vector<2x8x128xf32>
    %c0_9 = arith.constant 0 : index
    %c0_10 = arith.constant 0 : index
    %28 = vector.load %arg3[%c0_9, %c0_10] : memref<1x128xf32, #tpu.memory_space<vmem>>, vector<1x128xf32>
    %29 = vector.shape_cast %28 : vector<1x128xf32> to vector<1x1x128xf32>
    %30 = vector.broadcast %29 : vector<1x1x128xf32> to vector<2x8x128xf32>
    %31 = arith.addf %27, %30 : vector<2x8x128xf32>
    %32 = vector.shape_cast %31 : vector<2x8x128xf32> to vector<16x128xf32>
    %c0_11 = arith.constant 0 : index
    %c0_12 = arith.constant 0 : index
    %33 = vector.load %arg4[%c0_11, %c0_12] : memref<128x384xf32, #tpu.memory_space<vmem>>, vector<128x384xf32>
    %cst_13 = arith.constant dense<0.000000e+00> : vector<16x384xf32>
    %34 = tpu.matmul %32, %33, %cst_13 {dimension_numbers = #tpu.dot_dimension_numbers<[1], [0], [0], [1], [0, 0, 1, 1], [], []>} : vector<16x128xf32>, vector<128x384xf32>, vector<16x384xf32> -> vector<16x384xf32>
    %c0_14 = arith.constant 0 : index
    %c0_15 = arith.constant 0 : index
    %35 = vector.load %arg5[%c0_14, %c0_15] : memref<1x384xf32, #tpu.memory_space<vmem>>, vector<1x384xf32>
    %36 = vector.broadcast %35 : vector<1x384xf32> to vector<16x384xf32>
    %37 = arith.addf %34, %36 : vector<16x384xf32>
    %38 = vector.extract_strided_slice %37 {offsets = [0, 0], sizes = [16, 128], strides = [1, 1]} : vector<16x384xf32> to vector<16x128xf32>
    %39 = vector.shape_cast %38 : vector<16x128xf32> to vector<2x8x128xf32>
    %40 = vector.extract_strided_slice %37 {offsets = [0, 128], sizes = [16, 128], strides = [1, 1]} : vector<16x384xf32> to vector<16x128xf32>
    %41 = vector.shape_cast %40 : vector<16x128xf32> to vector<2x8x128xf32>
    %42 = vector.extract_strided_slice %37 {offsets = [0, 256], sizes = [16, 128], strides = [1, 1]} : vector<16x384xf32> to vector<16x128xf32>
    %43 = vector.shape_cast %42 : vector<16x128xf32> to vector<2x8x128xf32>
    %cst_16 = arith.constant -1.000000e+30 : f32
    %44 = vector.broadcast %cst_16 : f32 to vector<2x8x1xf32>
    %cst_17 = arith.constant 0.000000e+00 : f32
    %45 = vector.broadcast %cst_17 : f32 to vector<2x8x1xf32>
    %cst_18 = arith.constant 0.000000e+00 : f32
    %46 = vector.broadcast %cst_18 : f32 to vector<2x8x128xf32>
    %47 = vector.extract_strided_slice %41 {offsets = [0, 0, 0], sizes = [2, 8, 128], strides = [1, 1, 1]} : vector<2x8x128xf32> to vector<2x8x128xf32>
    %48 = vector.extract_strided_slice %43 {offsets = [0, 0, 0], sizes = [2, 8, 128], strides = [1, 1, 1]} : vector<2x8x128xf32> to vector<2x8x128xf32>
    "tpu.trace_start"() <{level = 10 : i32, message = "bqd,bkd->bqk"}> : () -> ()
    %cst_19 = arith.constant dense<0.000000e+00> : vector<2x8x8xf32>
    %49 = tpu.matmul %39, %47, %cst_19 {dimension_numbers = #tpu.dot_dimension_numbers<[2], [2], [1], [1], [0, 0, 0, 1, 1, 1], [0], [0]>} : vector<2x8x128xf32>, vector<2x8x128xf32>, vector<2x8x8xf32> -> vector<2x8x8xf32>
    "tpu.trace_stop"() : () -> ()
    %cst_20 = arith.constant dense<0xFF800000> : vector<2x8xf32>
    %50 = vector.multi_reduction <maximumf>, %49, %cst_20 [2] : vector<2x8x8xf32> to vector<2x8xf32>
    %51 = vector.shape_cast %50 : vector<2x8xf32> to vector<2x8x1xf32>
    %52 = arith.maximumf %44, %51 : vector<2x8x1xf32>
    %53 = arith.subf %44, %52 : vector<2x8x1xf32>
    %54 = math.exp %53 : vector<2x8x1xf32>
    %55 = vector.broadcast %52 : vector<2x8x1xf32> to vector<2x8x8xf32>
    %56 = arith.subf %49, %55 : vector<2x8x8xf32>
    %57 = math.exp %56 : vector<2x8x8xf32>
    %58 = arith.mulf %54, %45 : vector<2x8x1xf32>
    %cst_21 = arith.constant dense<0.000000e+00> : vector<2x8xf32>
    %59 = vector.multi_reduction <add>, %57, %cst_21 [2] : vector<2x8x8xf32> to vector<2x8xf32>
    %60 = vector.shape_cast %59 : vector<2x8xf32> to vector<2x8x1xf32>
    %61 = arith.addf %58, %60 : vector<2x8x1xf32>
    %62 = vector.broadcast %54 : vector<2x8x1xf32> to vector<2x8x128xf32>
    %63 = arith.mulf %62, %46 : vector<2x8x128xf32>
    "tpu.trace_start"() <{level = 10 : i32, message = "bqk,bkd->bqd"}> : () -> ()
    %cst_22 = arith.constant dense<0.000000e+00> : vector<2x8x128xf32>
    %64 = tpu.matmul %57, %48, %cst_22 {dimension_numbers = #tpu.dot_dimension_numbers<[2], [1], [1], [2], [0, 0, 0, 1, 1, 2], [0], [0]>} : vector<2x8x8xf32>, vector<2x8x128xf32>, vector<2x8x128xf32> -> vector<2x8x128xf32>
    "tpu.trace_stop"() : () -> ()
    %65 = arith.addf %63, %64 : vector<2x8x128xf32>
    %66 = tpu.reciprocal %61 {approx = true} : vector<2x8x1xf32> -> vector<2x8x1xf32>
    %67 = vector.broadcast %66 : vector<2x8x1xf32> to vector<2x8x128xf32>
    %68 = arith.mulf %65, %67 : vector<2x8x128xf32>
    %69 = vector.shape_cast %68 : vector<2x8x128xf32> to vector<16x128xf32>
    %c0_23 = arith.constant 0 : index
    %c0_24 = arith.constant 0 : index
    %70 = vector.load %arg6[%c0_23, %c0_24] : memref<128x128xf32, #tpu.memory_space<vmem>>, vector<128x128xf32>
    %cst_25 = arith.constant dense<0.000000e+00> : vector<16x128xf32>
    %71 = tpu.matmul %69, %70, %cst_25 {dimension_numbers = #tpu.dot_dimension_numbers<[1], [0], [0], [1], [0, 0, 1, 1], [], []>} : vector<16x128xf32>, vector<128x128xf32>, vector<16x128xf32> -> vector<16x128xf32>
    %c0_26 = arith.constant 0 : index
    %c0_27 = arith.constant 0 : index
    %72 = vector.load %arg7[%c0_26, %c0_27] : memref<1x128xf32, #tpu.memory_space<vmem>>, vector<1x128xf32>
    %73 = vector.broadcast %72 : vector<1x128xf32> to vector<16x128xf32>
    %74 = arith.addf %71, %73 : vector<16x128xf32>
    %75 = vector.shape_cast %74 : vector<16x128xf32> to vector<2x8x128xf32>
    %c0_28 = arith.constant 0 : index
    %c0_29 = arith.constant 0 : index
    %c0_30 = arith.constant 0 : index
    %76 = vector.load %arg8[%c0_28, %c0_29, %c0_30] : memref<2x8x128xf32, #tpu.memory_space<vmem>>, vector<2x8x128xf32>
    tpu.vector_store %arg8[%c0_28, %c0_29, %c0_30], %75 {strides = array<i32>} : memref<2x8x128xf32, #tpu.memory_space<vmem>>, vector<2x8x128xf32>,
    return
  }
  func.func @transform_0(%arg0: i32) -> (i32, i32, i32) {
    %c0_i32 = arith.constant 0 : i32
    %c0_i32_0 = arith.constant 0 : i32
    %c0_i32_1 = arith.constant 0 : i32
    return %arg0, %c0_i32, %c0_i32_0 : i32, i32, i32
  }
  func.func @transform_1(%arg0: i32) -> (i32, i32) {
    %c0_i32 = arith.constant 0 : i32
    %c0_i32_0 = arith.constant 0 : i32
    %c0_i32_1 = arith.constant 0 : i32
    return %c0_i32, %c0_i32_0 : i32, i32
  }
  func.func @transform_2(%arg0: i32) -> (i32, i32) {
    %c0_i32 = arith.constant 0 : i32
    %c0_i32_0 = arith.constant 0 : i32
    %c0_i32_1 = arith.constant 0 : i32
    return %c0_i32, %c0_i32_0 : i32, i32
  }
  func.func @transform_3(%arg0: i32) -> (i32, i32) {
    %c0_i32 = arith.constant 0 : i32
    %c0_i32_0 = arith.constant 0 : i32
    %c0_i32_1 = arith.constant 0 : i32
    return %c0_i32, %c0_i32_0 : i32, i32
  }
  func.func @transform_4(%arg0: i32) -> (i32, i32) {
    %c0_i32 = arith.constant 0 : i32
    %c0_i32_0 = arith.constant 0 : i32
    %c0_i32_1 = arith.constant 0 : i32
    return %c0_i32, %c0_i32_0 : i32, i32
  }
  func.func @transform_5(%arg0: i32) -> (i32, i32) {
    %c0_i32 = arith.constant 0 : i32
    %c0_i32_0 = arith.constant 0 : i32
    %c0_i32_1 = arith.constant 0 : i32
    return %c0_i32, %c0_i32_0 : i32, i32
  }
  func.func @transform_6(%arg0: i32) -> (i32, i32) {
    %c0_i32 = arith.constant 0 : i32
    %c0_i32_0 = arith.constant 0 : i32
    %c0_i32_1 = arith.constant 0 : i32
    return %c0_i32, %c0_i32_0 : i32, i32
  }
  func.func @transform_7(%arg0: i32) -> (i32, i32, i32) {
    %c0_i32 = arith.constant 0 : i32
    %c0_i32_0 = arith.constant 0 : i32
    %c0_i32_1 = arith.constant 0 : i32
    return %arg0, %c0_i32, %c0_i32_0 : i32, i32, i32
  }
}

</mosaic_0001>

<llo_original>
// kernel: mhsa_forward.1
$region0: #{mhsa_forward.1}
  #allocation0 [shape = 'u32[]', space=smem, size = 0x4, offset = 0x4, fixed_abs, tag = 'smem constant byte address 0x4 - core index']
  #allocation1 [shape = 'u32[144,128]{1,0:T(1,128)}', space=vmem, size = 0x12000, scoped, tag = 'internal scratch']
  %s0 = inlined_call_operand.vmem [shape: f32[2,8,128], index: 0, kind: input, shape index: {}]
  %s1 = inlined_call_operand.vmem [shape: f32[1,128], index: 1, kind: input, shape index: {}]
  %s2 = inlined_call_operand.vmem [shape: f32[1,128], index: 2, kind: input, shape index: {}]
  %s3 = inlined_call_operand.vmem [shape: f32[128,384], index: 3, kind: input, shape index: {}]
  %s4 = inlined_call_operand.vmem [shape: f32[1,384], index: 4, kind: input, shape index: {}]
  %s5 = inlined_call_operand.vmem [shape: f32[128,128], index: 5, kind: input, shape index: {}]
  %s6 = inlined_call_operand.vmem [shape: f32[1,128], index: 6, kind: input, shape index: {}]
  %s7 = inlined_call_operand.vmem [shape: f32[2,8,128], index: 7, kind: output, shape index: {}]
  %s8 = sld [smem:[#allocation0]]
  $region38: #{mhsa_forward.1} parent=0
    _
  %s10 = ssub.s32 1, %s8
  %s11 = scalar_select 0, %s10, %s8
  // Predicated region
  $region2: #{mhsa_forward.1} parent=0 // pred_check
    _
  $region3: #{mhsa_forward.1} parent=0 // pred_check_branch
    %13 = sbr.rel (0) target = $region5
  $region4: #{mhsa_forward.1} parent=0 // pred_region
    _
  $region5: #{mhsa_forward.1} parent=0 // pred_fallthru
    _
  // Predicated region
  $region6: #{mhsa_forward.1} parent=0 // pred_check
    _
  $region7: #{mhsa_forward.1} parent=0 // pred_check_branch
    %15 = sbr.rel (0) target = $region9
  $region8: #{mhsa_forward.1} parent=0 // pred_region
    _
  $region9: #{mhsa_forward.1} parent=0 // pred_fallthru
    _
  // Predicated region
  $region10: #{mhsa_forward.1} parent=0 // pred_check
    _
  $region11: #{mhsa_forward.1} parent=0 // pred_check_branch
    %17 = sbr.rel (0) target = $region13
  $region12: #{mhsa_forward.1} parent=0 // pred_region
    _
  $region13: #{mhsa_forward.1} parent=0 // pred_fallthru
    _
  // Predicated region
  $region14: #{mhsa_forward.1} parent=0 // pred_check
    _
  $region15: #{mhsa_forward.1} parent=0 // pred_check_branch
    %19 = sbr.rel (0) target = $region17
  $region16: #{mhsa_forward.1} parent=0 // pred_region
    _
  $region17: #{mhsa_forward.1} parent=0 // pred_fallthru
    _
  // Predicated region
  $region18: #{mhsa_forward.1} parent=0 // pred_check
    _
  $region19: #{mhsa_forward.1} parent=0 // pred_check_branch
    %21 = sbr.rel (0) target = $region21
  $region20: #{mhsa_forward.1} parent=0 // pred_region
    _
  $region21: #{mhsa_forward.1} parent=0 // pred_fallthru
    _
  // Predicated region
  $region22: #{mhsa_forward.1} parent=0 // pred_check
    _
  $region23: #{mhsa_forward.1} parent=0 // pred_check_branch
    %23 = sbr.rel (0) target = $region25
  $region24: #{mhsa_forward.1} parent=0 // pred_region
    _
  $region25: #{mhsa_forward.1} parent=0 // pred_fallthru
    _
  // Predicated region
  $region26: #{mhsa_forward.1} parent=0 // pred_check
    _
  $region27: #{mhsa_forward.1} parent=0 // pred_check_branch
    %25 = sbr.rel (0) target = $region29
  $region28: #{mhsa_forward.1} parent=0 // pred_region
    _
  $region29: #{mhsa_forward.1} parent=0 // pred_fallthru
    _
  %v26 = vld [vmem:[%s0] sm:$0xff]
  %v27 = vld [vmem:[%s0 + $0x8] sm:$0xff]
  %28 = vadd.xlane.f32.xlu0 %v26
  %v29 = vpop.xlane.xlu0 %28
  %30 = vadd.xlane.f32.xlu0 %v27
  %v31 = vpop.xlane.xlu0 %30
  %v32 = vmul.f32 %v29, 0.03125
  %v33 = vmul.f32 %v31, 0.03125
  %v34 = vsub.f32 %v26, %v32
  %v35 = vsub.f32 %v27, %v33
  %v36 = vlaneseq
  %v37 = vand.u32 %v36, 127
  %vm38 = vcmp.lt.s32.totalorder %v37, 32
  %v39 = vsel %vm38, 1, 0
  %vm40 = vcmp.eq.s32.totalorder %v39, 1
  %v41 = vsel %vm40, %v34, 0.0
  %v42 = vsel %vm40, %v35, 0.0
  %v43 = vmul.f32 %v41, %v41
  %v44 = vmul.f32 %v42, %v42
  %45 = vadd.xlane.f32.xlu0 %v43
  %v46 = vpop.xlane.xlu0 %45
  %47 = vadd.xlane.f32.xlu0 %v44
  %v48 = vpop.xlane.xlu0 %47
  %v49 = vmul.f32 %v46, 0.03125
  %v50 = vmul.f32 %v48, 0.03125
  %v51 = vadd.f32 %v49, 1e-05
  %v52 = vadd.f32 %v50, 1e-05
  %v53 = vrsqrt.pop %v51
  %v54 = vrsqrt.pop %v52
  %v55 = vmul.f32 %v41, %v53
  %v56 = vmul.f32 %v42, %v54
  %v57 = vld [vmem:[%s1] sm:$0x1]
  %v59 = vlaneseq
  %v60 = vshrl.u32 %v59, 7
  %v61 = vsub.s32 0, %v60
  %v62 = vrot.slane %v57, %v61
  %v64 = vmul.f32 %v55, %v62
  %v65 = vmul.f32 %v56, %v62
  %v66 = vld [vmem:[%s2] sm:$0x1]
  %v68 = vlaneseq
  %v69 = vshrl.u32 %v68, 7
  %v70 = vsub.s32 0, %v69
  %v71 = vrot.slane %v66, %v70
  %v73 = vadd.f32 %v64, %v71
  %v74 = vadd.f32 %v65, %v71
  %v75 = vld [vmem:[%s3] sm:$0xff]
  %v76 = vld [vmem:[%s3 + $0x8] sm:$0xff]
  %v77 = vld [vmem:[%s3 + $0x10] sm:$0xff]
  %v78 = vld [vmem:[%s3 + $0x18] sm:$0xff]
  %v79 = vld [vmem:[%s3 + $0x20] sm:$0xff]
  %v80 = vld [vmem:[%s3 + $0x28] sm:$0xff]
  %v81 = vld [vmem:[%s3 + $0x30] sm:$0xff]
  %v82 = vld [vmem:[%s3 + $0x38] sm:$0xff]
  %v83 = vld [vmem:[%s3 + $0x40] sm:$0xff]
  %v84 = vld [vmem:[%s3 + $0x48] sm:$0xff]
  %v85 = vld [vmem:[%s3 + $0x50] sm:$0xff]
  %v86 = vld [vmem:[%s3 + $0x58] sm:$0xff]
  %v87 = vld [vmem:[%s3 + $0x60] sm:$0xff]
  %v88 = vld [vmem:[%s3 + $0x68] sm:$0xff]
  %v89 = vld [vmem:[%s3 + $0x70] sm:$0xff]
  %v90 = vld [vmem:[%s3 + $0x78] sm:$0xff]
  %v91 = vld [vmem:[%s3 + $0x80] sm:$0xff]
  %v92 = vld [vmem:[%s3 + $0x88] sm:$0xff]
  %v93 = vld [vmem:[%s3 + $0x90] sm:$0xff]
  %v94 = vld [vmem:[%s3 + $0x98] sm:$0xff]
  %v95 = vld [vmem:[%s3 + $0xa0] sm:$0xff]
  %v96 = vld [vmem:[%s3 + $0xa8] sm:$0xff]
  %v97 = vld [vmem:[%s3 + $0xb0] sm:$0xff]
  %v98 = vld [vmem:[%s3 + $0xb8] sm:$0xff]
  %v99 = vld [vmem:[%s3 + $0xc0] sm:$0xff]
  %v100 = vld [vmem:[%s3 + $0xc8] sm:$0xff]
  %v101 = vld [vmem:[%s3 + $0xd0] sm:$0xff]
  %v102 = vld [vmem:[%s3 + $0xd8] sm:$0xff]
  %v103 = vld [vmem:[%s3 + $0xe0] sm:$0xff]
  %v104 = vld [vmem:[%s3 + $0xe8] sm:$0xff]
  %v105 = vld [vmem:[%s3 + $0xf0] sm:$0xff]
  %v106 = vld [vmem:[%s3 + $0xf8] sm:$0xff]
  %v107 = vld [vmem:[%s3 + $0x100] sm:$0xff]
  %v108 = vld [vmem:[%s3 + $0x108] sm:$0xff]
  %v109 = vld [vmem:[%s3 + $0x110] sm:$0xff]
  %v110 = vld [vmem:[%s3 + $0x118] sm:$0xff]
  %v111 = vld [vmem:[%s3 + $0x120] sm:$0xff]
  %v112 = vld [vmem:[%s3 + $0x128] sm:$0xff]
  %v113 = vld [vmem:[%s3 + $0x130] sm:$0xff]
  %v114 = vld [vmem:[%s3 + $0x138] sm:$0xff]
  %v115 = vld [vmem:[%s3 + $0x140] sm:$0xff]
  %v116 = vld [vmem:[%s3 + $0x148] sm:$0xff]
  %v117 = vld [vmem:[%s3 + $0x150] sm:$0xff]
  %v118 = vld [vmem:[%s3 + $0x158] sm:$0xff]
  %v119 = vld [vmem:[%s3 + $0x160] sm:$0xff]
  %v120 = vld [vmem:[%s3 + $0x168] sm:$0xff]
  %v121 = vld [vmem:[%s3 + $0x170] sm:$0xff]
  %v122 = vld [vmem:[%s3 + $0x178] sm:$0xff]
  %v123 = vld [vmem:[%s4] sm:$0x7]
  %v125 = vlaneseq
  %v126 = vshrl.u32 %v125, 7
  %v127 = vsub.s32 0, %v126
  %v128 = vrot.slane %v123, %v127
  %v129 = vlaneseq
  %v130 = vshrl.u32 %v129, 7
  %v131 = vsub.s32 1, %v130
  %v132 = vrot.slane %v123, %v131
  %v133 = vlaneseq
  %v134 = vshrl.u32 %v133, 7
  %v135 = vsub.s32 2, %v134
  %v136 = vrot.slane %v123, %v135
  %140 = vmatprep.subr.mxu0 %v121
  %141 = vmatpush1.msra.mxu0 %v120
  %142 = vmatprep.subr.mxu0 %v118
  %143 = vmatpush1.msra.mxu0 %v117
  %144 = vmatprep.subr.mxu0 %v115
  %145 = vmatpush1.msra.mxu0 %v114
  %146 = vmatprep.subr.mxu0 %v112
  %147 = vmatpush1.msra.mxu0 %v111
  %148 = vmatprep.subr.mxu0 %v109
  %149 = vmatpush1.msra.mxu0 %v108
  %150 = vmatprep.subr.mxu0 %v106
  %151 = vmatpush1.msra.mxu0 %v105
  %152 = vmatprep.subr.mxu0 %v103
  %153 = vmatpush1.msra.mxu0 %v102
  %154 = vmatprep.subr.mxu0 %v100
  %155 = vmatpush1.msra.mxu0 %v99
  %156 = vmatprep.subr.mxu0 %v97
  %157 = vmatpush1.msra.mxu0 %v96
  %158 = vmatprep.subr.mxu0 %v94
  %159 = vmatpush1.msra.mxu0 %v93
  %160 = vmatprep.subr.mxu0 %v91
  %161 = vmatpush1.msra.mxu0 %v90
  %162 = vmatprep.subr.mxu0 %v88
  %163 = vmatpush1.msra.mxu0 %v87
  %164 = vmatprep.subr.mxu0 %v85
  %165 = vmatpush1.msra.mxu0 %v84
  %166 = vmatprep.subr.mxu0 %v82
  %167 = vmatpush1.msra.mxu0 %v81
  %168 = vmatprep.subr.mxu0 %v79
  %169 = vmatpush1.msra.mxu0 %v78
  %170 = vmatprep.subr.mxu0 %v76
  %171 = vmatpush1.msra.mxu0 %v75
  %172 = vmatprep.subr.mxu0 0.0
  %173 = vmatpush2.msra.mxu0 0.0
  %174 = vmatprep.subr.mxu0 0.0
  %175 = vmatpush2.msra.mxu0 0.0
  %176 = vmatprep.subr.mxu0 0.0
  %177 = vmatpush2.msra.mxu0 0.0
  %178 = vmatprep.subr.mxu0 0.0
  %179 = vmatpush2.msra.mxu0 0.0
  %180 = vmatprep.subr.mxu0 0.0
  %181 = vmatpush2.msra.mxu0 0.0
  %182 = vmatprep.subr.mxu0 0.0
  %183 = vmatpush2.msra.mxu0 0.0
  %184 = vmatprep.subr.mxu0 0.0
  %185 = vmatpush2.msra.mxu0 0.0
  %186 = vmatprep.subr.mxu0 0.0
  %187 = vmatpush2.msra.mxu0 0.0
  %188 = vmatprep.subr.mxu0 0.0
  %189 = vmatpush2.msra.mxu0 0.0
  %190 = vmatprep.subr.mxu0 0.0
  %191 = vmatpush2.msra.mxu0 0.0
  %192 = vmatprep.subr.mxu0 0.0
  %193 = vmatpush2.msra.mxu0 0.0
  %194 = vmatprep.subr.mxu0 0.0
  %195 = vmatpush2.msra.mxu0 0.0
  %196 = vmatprep.subr.mxu0 0.0
  %197 = vmatpush2.msra.mxu0 0.0
  %198 = vmatprep.subr.mxu0 0.0
  %199 = vmatpush2.msra.mxu0 0.0
  %200 = vmatprep.subr.mxu0 0.0
  %201 = vmatpush2.msra.mxu0 0.0
  %202 = vmatprep.subr.mxu0 0.0
  %203 = vmatpush2.msra.mxu0 0.0
  %204 = vmatprep.mubr.f32.mxu0 0.0
  %205 = vmatmul.mubr.f32.gmra.mxu0 %v73
  %v206 = vpop.f32.mrf.mxu0
  %v207 = vadd.f32 %v128, %v206
  %v208 = vpop.f32.mrf.mxu0
  %v209 = vadd.f32 %v132, %v208
  %210 = vmatprep.mubr.f32.mxu0 0.0
  %211 = vmatmul.mubr.f32.gmra.mxu0 %v74
  %v212 = vpop.f32.mrf.mxu0
  %v213 = vadd.f32 %v128, %v212
  %v214 = vpop.f32.mrf.mxu0
  %v215 = vadd.f32 %v132, %v214
  %216 = vdwg.mxu0
  %217 = vmatprep.subr.mxu0 0.0
  %218 = vmatpush1.msra.mxu0 %v122
  %219 = vmatprep.subr.mxu0 0.0
  %220 = vmatpush1.msra.mxu0 %v119
  %221 = vmatprep.subr.mxu0 0.0
  %222 = vmatpush1.msra.mxu0 %v116
  %223 = vmatprep.subr.mxu0 0.0
  %224 = vmatpush1.msra.mxu0 %v113
  %225 = vmatprep.subr.mxu0 0.0
  %226 = vmatpush1.msra.mxu0 %v110
  %227 = vmatprep.subr.mxu0 0.0
  %228 = vmatpush1.msra.mxu0 %v107
  %229 = vmatprep.subr.mxu0 0.0
  %230 = vmatpush1.msra.mxu0 %v104
  %231 = vmatprep.subr.mxu0 0.0
  %232 = vmatpush1.msra.mxu0 %v101
  %233 = vmatprep.subr.mxu0 0.0
  %234 = vmatpush1.msra.mxu0 %v98
  %235 = vmatprep.subr.mxu0 0.0
  %236 = vmatpush1.msra.mxu0 %v95
  %237 = vmatprep.subr.mxu0 0.0
  %238 = vmatpush1.msra.mxu0 %v92
  %239 = vmatprep.subr.mxu0 0.0
  %240 = vmatpush1.msra.mxu0 %v89
  %241 = vmatprep.subr.mxu0 0.0
  %242 = vmatpush1.msra.mxu0 %v86
  %243 = vmatprep.subr.mxu0 0.0
  %244 = vmatpush1.msra.mxu0 %v83
  %245 = vmatprep.subr.mxu0 0.0
  %246 = vmatpush1.msra.mxu0 %v80
  %247 = vmatprep.subr.mxu0 0.0
  %248 = vmatpush1.msra.mxu0 %v77
  %249 = vmatprep.subr.mxu0 0.0
  %250 = vmatpush2.msra.mxu0 0.0
  %251 = vmatprep.subr.mxu0 0.0
  %252 = vmatpush2.msra.mxu0 0.0
  %253 = vmatprep.subr.mxu0 0.0
  %254 = vmatpush2.msra.mxu0 0.0
  %255 = vmatprep.subr.mxu0 0.0
  %256 = vmatpush2.msra.mxu0 0.0
  %257 = vmatprep.subr.mxu0 0.0
  %258 = vmatpush2.msra.mxu0 0.0
  %259 = vmatprep.subr.mxu0 0.0
  %260 = vmatpush2.msra.mxu0 0.0
  %261 = vmatprep.subr.mxu0 0.0
  %262 = vmatpush2.msra.mxu0 0.0
  %263 = vmatprep.subr.mxu0 0.0
  %264 = vmatpush2.msra.mxu0 0.0
  %265 = vmatprep.subr.mxu0 0.0
  %266 = vmatpush2.msra.mxu0 0.0
  %267 = vmatprep.subr.mxu0 0.0
  %268 = vmatpush2.msra.mxu0 0.0
  %269 = vmatprep.subr.mxu0 0.0
  %270 = vmatpush2.msra.mxu0 0.0
  %271 = vmatprep.subr.mxu0 0.0
  %272 = vmatpush2.msra.mxu0 0.0
  %273 = vmatprep.subr.mxu0 0.0
  %274 = vmatpush2.msra.mxu0 0.0
  %275 = vmatprep.subr.mxu0 0.0
  %276 = vmatpush2.msra.mxu0 0.0
  %277 = vmatprep.subr.mxu0 0.0
  %278 = vmatpush2.msra.mxu0 0.0
  %279 = vmatprep.subr.mxu0 0.0
  %280 = vmatpush2.msra.mxu0 0.0
  %281 = vmatprep.mubr.f32.mxu0 0.0
  %282 = vmatmul.mubr.f32.gmra.mxu0 %v73
  %v283 = vpop.f32.mrf.mxu0
  %v284 = vadd.f32 %v136, %v283
  %v285 = vpop.f32.mrf.mxu0
  %286 = vmatprep.mubr.f32.mxu0 0.0
  %287 = vmatmul.mubr.f32.gmra.mxu0 %v74
  %v288 = vpop.f32.mrf.mxu0
  %v289 = vadd.f32 %v136, %v288
  %v290 = vpop.f32.mrf.mxu0
  %291 = vdwg.mxu0
  %292 = vmatprep.subr.mxu0 0.0
  %293 = vmatpush1.xpose.msra.mxu0 0.0
  %294 = vmatprep.subr.mxu0 0.0
  %295 = vmatpush1.xpose.msra.mxu0 0.0
  %296 = vmatprep.subr.mxu0 0.0
  %297 = vmatpush1.xpose.msra.mxu0 0.0
  %298 = vmatprep.subr.mxu0 0.0
  %299 = vmatpush1.xpose.msra.mxu0 0.0
  %300 = vmatprep.subr.mxu0 0.0
  %301 = vmatpush1.xpose.msra.mxu0 0.0
  %302 = vmatprep.subr.mxu0 0.0
  %303 = vmatpush1.xpose.msra.mxu0 0.0
  %304 = vmatprep.subr.mxu0 0.0
  %305 = vmatpush1.xpose.msra.mxu0 0.0
  %306 = vmatprep.subr.mxu0 0.0
  %307 = vmatpush1.xpose.msra.mxu0 0.0
  %308 = vmatprep.subr.mxu0 0.0
  %309 = vmatpush1.xpose.msra.mxu0 0.0
  %310 = vmatprep.subr.mxu0 0.0
  %311 = vmatpush1.xpose.msra.mxu0 0.0
  %312 = vmatprep.subr.mxu0 0.0
  %313 = vmatpush1.xpose.msra.mxu0 0.0
  %314 = vmatprep.subr.mxu0 0.0
  %315 = vmatpush1.xpose.msra.mxu0 0.0
  %316 = vmatprep.subr.mxu0 0.0
  %317 = vmatpush1.xpose.msra.mxu0 0.0
  %318 = vmatprep.subr.mxu0 0.0
  %319 = vmatpush1.xpose.msra.mxu0 0.0
  %320 = vmatprep.subr.mxu0 0.0
  %321 = vmatpush1.xpose.msra.mxu0 0.0
  %322 = vmatprep.subr.mxu0 0.0
  %323 = vmatpush1.xpose.msra.mxu0 %v209
  %324 = vmatprep.subr.mxu0 0.0
  %325 = vmatpush2.xpose.msra.mxu0 0.0
  %326 = vmatprep.subr.mxu0 0.0
  %327 = vmatpush2.xpose.msra.mxu0 0.0
  %328 = vmatprep.subr.mxu0 0.0
  %329 = vmatpush2.xpose.msra.mxu0 0.0
  %330 = vmatprep.subr.mxu0 0.0
  %331 = vmatpush2.xpose.msra.mxu0 0.0
  %332 = vmatprep.subr.mxu0 0.0
  %333 = vmatpush2.xpose.msra.mxu0 0.0
  %334 = vmatprep.subr.mxu0 0.0
  %335 = vmatpush2.xpose.msra.mxu0 0.0
  %336 = vmatprep.subr.mxu0 0.0
  %337 = vmatpush2.xpose.msra.mxu0 0.0
  %338 = vmatprep.subr.mxu0 0.0
  %339 = vmatpush2.xpose.msra.mxu0 0.0
  %340 = vmatprep.subr.mxu0 0.0
  %341 = vmatpush2.xpose.msra.mxu0 0.0
  %342 = vmatprep.subr.mxu0 0.0
  %343 = vmatpush2.xpose.msra.mxu0 0.0
  %344 = vmatprep.subr.mxu0 0.0
  %345 = vmatpush2.xpose.msra.mxu0 0.0
  %346 = vmatprep.subr.mxu0 0.0
  %347 = vmatpush2.xpose.msra.mxu0 0.0
  %348 = vmatprep.subr.mxu0 0.0
  %349 = vmatpush2.xpose.msra.mxu0 0.0
  %350 = vmatprep.subr.mxu0 0.0
  %351 = vmatpush2.xpose.msra.mxu0 0.0
  %352 = vmatprep.subr.mxu0 0.0
  %353 = vmatpush2.xpose.msra.mxu0 0.0
  %354 = vmatprep.subr.mxu0 0.0
  %355 = vmatpush2.xpose.msra.mxu0 0.0
  %356 = vmatprep.mubr.f32.mxu0 0.0
  %357 = vmatmul.mubr.f32.gmra.mxu0 %v207
  %v358 = vpop.f32.mrf.mxu0
  %v359 = vadd.f32 0.0, %v358
  %v360 = vpop.f32.mrf.mxu0
  %361 = vdwg.mxu0
  %362 = vmatprep.subr.mxu0 0.0
  %363 = vmatpush1.xpose.msra.mxu0 0.0
  %364 = vmatprep.subr.mxu0 0.0
  %365 = vmatpush1.xpose.msra.mxu0 0.0
  %366 = vmatprep.subr.mxu0 0.0
  %367 = vmatpush1.xpose.msra.mxu0 0.0
  %368 = vmatprep.subr.mxu0 0.0
  %369 = vmatpush1.xpose.msra.mxu0 0.0
  %370 = vmatprep.subr.mxu0 0.0
  %371 = vmatpush1.xpose.msra.mxu0 0.0
  %372 = vmatprep.subr.mxu0 0.0
  %373 = vmatpush1.xpose.msra.mxu0 0.0
  %374 = vmatprep.subr.mxu0 0.0
  %375 = vmatpush1.xpose.msra.mxu0 0.0
  %376 = vmatprep.subr.mxu0 0.0
  %377 = vmatpush1.xpose.msra.mxu0 0.0
  %378 = vmatprep.subr.mxu0 0.0
  %379 = vmatpush1.xpose.msra.mxu0 0.0
  %380 = vmatprep.subr.mxu0 0.0
  %381 = vmatpush1.xpose.msra.mxu0 0.0
  %382 = vmatprep.subr.mxu0 0.0
  %383 = vmatpush1.xpose.msra.mxu0 0.0
  %384 = vmatprep.subr.mxu0 0.0
  %385 = vmatpush1.xpose.msra.mxu0 0.0
  %386 = vmatprep.subr.mxu0 0.0
  %387 = vmatpush1.xpose.msra.mxu0 0.0
  %388 = vmatprep.subr.mxu0 0.0
  %389 = vmatpush1.xpose.msra.mxu0 0.0
  %390 = vmatprep.subr.mxu0 0.0
  %391 = vmatpush1.xpose.msra.mxu0 0.0
  %392 = vmatprep.subr.mxu0 0.0
  %393 = vmatpush1.xpose.msra.mxu0 %v215
  %394 = vmatprep.subr.mxu0 0.0
  %395 = vmatpush2.xpose.msra.mxu0 0.0
  %396 = vmatprep.subr.mxu0 0.0
  %397 = vmatpush2.xpose.msra.mxu0 0.0
  %398 = vmatprep.subr.mxu0 0.0
  %399 = vmatpush2.xpose.msra.mxu0 0.0
  %400 = vmatprep.subr.mxu0 0.0
  %401 = vmatpush2.xpose.msra.mxu0 0.0
  %402 = vmatprep.subr.mxu0 0.0
  %403 = vmatpush2.xpose.msra.mxu0 0.0
  %404 = vmatprep.subr.mxu0 0.0
  %405 = vmatpush2.xpose.msra.mxu0 0.0
  %406 = vmatprep.subr.mxu0 0.0
  %407 = vmatpush2.xpose.msra.mxu0 0.0
  %408 = vmatprep.subr.mxu0 0.0
  %409 = vmatpush2.xpose.msra.mxu0 0.0
  %410 = vmatprep.subr.mxu0 0.0
  %411 = vmatpush2.xpose.msra.mxu0 0.0
  %412 = vmatprep.subr.mxu0 0.0
  %413 = vmatpush2.xpose.msra.mxu0 0.0
  %414 = vmatprep.subr.mxu0 0.0
  %415 = vmatpush2.xpose.msra.mxu0 0.0
  %416 = vmatprep.subr.mxu0 0.0
  %417 = vmatpush2.xpose.msra.mxu0 0.0
  %418 = vmatprep.subr.mxu0 0.0
  %419 = vmatpush2.xpose.msra.mxu0 0.0
  %420 = vmatprep.subr.mxu0 0.0
  %421 = vmatpush2.xpose.msra.mxu0 0.0
  %422 = vmatprep.subr.mxu0 0.0
  %423 = vmatpush2.xpose.msra.mxu0 0.0
  %424 = vmatprep.subr.mxu0 0.0
  %425 = vmatpush2.xpose.msra.mxu0 0.0
  %426 = vmatprep.mubr.f32.mxu0 0.0
  %427 = vmatmul.mubr.f32.gmra.mxu0 %v213
  %v428 = vpop.f32.mrf.mxu0
  %v429 = vadd.f32 0.0, %v428
  %v430 = vpop.f32.mrf.mxu0
  %431 = vdwg.mxu0
  %vm432 = vcmask 64512
  %v433 = vsel %vm432, %v359, -inf
  %434 = vmax.xlane.f32.xlu0 %v433
  %v435 = vpop.xlane.xlu0 %434
  %v436 = vsel %vm432, %v429, -inf
  %437 = vmax.xlane.f32.xlu0 %v436
  %v438 = vpop.xlane.xlu0 %437
  %v439 = vmax.f32 %v435, -1e+30
  %v440 = vmax.f32 %v438, -1e+30
  %v441 = vsub.f32 -1e+30, %v439
  %v442 = vsub.f32 -1e+30, %v440
  %v443 = vmul.f32 %v441, 1.442695
  %v444 = vpow.pop %v443
  %v445 = vmul.f32 %v442, 1.442695
  %v446 = vpow.pop %v445
  %v447 = vsub.f32 %v359, %v439
  %v448 = vsub.f32 %v429, %v440
  %v449 = vmul.f32 %v447, 1.442695
  %v450 = vpow.pop %v449
  %v451 = vmul.f32 %v448, 1.442695
  %v452 = vpow.pop %v451
  %v453 = vmul.f32 %v444, 0.0
  %v454 = vmul.f32 %v446, 0.0
  %v455 = vsel %vm432, %v450, 0.0
  %456 = vadd.xlane.f32.xlu0 %v455
  %v457 = vpop.xlane.xlu0 %456
  %v458 = vsel %vm432, %v452, 0.0
  %459 = vadd.xlane.f32.xlu0 %v458
  %v460 = vpop.xlane.xlu0 %459
  %v461 = vadd.f32 %v453, %v457
  %v462 = vadd.f32 %v454, %v460
  %v464 = vsel %vm432, %v450, 0
  %466 = vmatprep.subr.mxu0 0.0
  %467 = vmatpush1.msra.mxu0 0.0
  %468 = vmatprep.subr.mxu0 0.0
  %469 = vmatpush1.msra.mxu0 0.0
  %470 = vmatprep.subr.mxu0 0.0
  %471 = vmatpush1.msra.mxu0 0.0
  %472 = vmatprep.subr.mxu0 0.0
  %473 = vmatpush1.msra.mxu0 0.0
  %474 = vmatprep.subr.mxu0 0.0
  %475 = vmatpush1.msra.mxu0 0.0
  %476 = vmatprep.subr.mxu0 0.0
  %477 = vmatpush1.msra.mxu0 0.0
  %478 = vmatprep.subr.mxu0 0.0
  %479 = vmatpush1.msra.mxu0 0.0
  %480 = vmatprep.subr.mxu0 0.0
  %481 = vmatpush1.msra.mxu0 0.0
  %482 = vmatprep.subr.mxu0 0.0
  %483 = vmatpush1.msra.mxu0 0.0
  %484 = vmatprep.subr.mxu0 0.0
  %485 = vmatpush1.msra.mxu0 0.0
  %486 = vmatprep.subr.mxu0 0.0
  %487 = vmatpush1.msra.mxu0 0.0
  %488 = vmatprep.subr.mxu0 0.0
  %489 = vmatpush1.msra.mxu0 0.0
  %490 = vmatprep.subr.mxu0 0.0
  %491 = vmatpush1.msra.mxu0 0.0
  %492 = vmatprep.subr.mxu0 0.0
  %493 = vmatpush1.msra.mxu0 0.0
  %494 = vmatprep.subr.mxu0 0.0
  %495 = vmatpush1.msra.mxu0 0.0
  %496 = vmatprep.subr.mxu0 0.0
  %497 = vmatpush1.msra.mxu0 %v284
  %498 = vmatprep.subr.mxu0 0.0
  %499 = vmatpush2.msra.mxu0 0.0
  %500 = vmatprep.subr.mxu0 0.0
  %501 = vmatpush2.msra.mxu0 0.0
  %502 = vmatprep.subr.mxu0 0.0
  %503 = vmatpush2.msra.mxu0 0.0
  %504 = vmatprep.subr.mxu0 0.0
  %505 = vmatpush2.msra.mxu0 0.0
  %506 = vmatprep.subr.mxu0 0.0
  %507 = vmatpush2.msra.mxu0 0.0
  %508 = vmatprep.subr.mxu0 0.0
  %509 = vmatpush2.msra.mxu0 0.0
  %510 = vmatprep.subr.mxu0 0.0
  %511 = vmatpush2.msra.mxu0 0.0
  %512 = vmatprep.subr.mxu0 0.0
  %513 = vmatpush2.msra.mxu0 0.0
  %514 = vmatprep.subr.mxu0 0.0
  %515 = vmatpush2.msra.mxu0 0.0
  %516 = vmatprep.subr.mxu0 0.0
  %517 = vmatpush2.msra.mxu0 0.0
  %518 = vmatprep.subr.mxu0 0.0
  %519 = vmatpush2.msra.mxu0 0.0
  %520 = vmatprep.subr.mxu0 0.0
  %521 = vmatpush2.msra.mxu0 0.0
  %522 = vmatprep.subr.mxu0 0.0
  %523 = vmatpush2.msra.mxu0 0.0
  %524 = vmatprep.subr.mxu0 0.0
  %525 = vmatpush2.msra.mxu0 0.0
  %526 = vmatprep.subr.mxu0 0.0
  %527 = vmatpush2.msra.mxu0 0.0
  %528 = vmatprep.subr.mxu0 0.0
  %529 = vmatpush2.msra.mxu0 0.0
  %530 = vmatprep.mubr.f32.mxu0 0.0
  %531 = vmatmul.mubr.f32.gmra.mxu0 %v464
  %v532 = vpop.f32.mrf.mxu0
  %v533 = vadd.f32 0.0, %v532
  %v534 = vpop.f32.mrf.mxu0
  %535 = vdwg.mxu0
  %v537 = vsel %vm432, %v452, 0
  %539 = vmatprep.subr.mxu0 0.0
  %540 = vmatpush1.msra.mxu0 0.0
  %541 = vmatprep.subr.mxu0 0.0
  %542 = vmatpush1.msra.mxu0 0.0
  %543 = vmatprep.subr.mxu0 0.0
  %544 = vmatpush1.msra.mxu0 0.0
  %545 = vmatprep.subr.mxu0 0.0
  %546 = vmatpush1.msra.mxu0 0.0
  %547 = vmatprep.subr.mxu0 0.0
  %548 = vmatpush1.msra.mxu0 0.0
  %549 = vmatprep.subr.mxu0 0.0
  %550 = vmatpush1.msra.mxu0 0.0
  %551 = vmatprep.subr.mxu0 0.0
  %552 = vmatpush1.msra.mxu0 0.0
  %553 = vmatprep.subr.mxu0 0.0
  %554 = vmatpush1.msra.mxu0 0.0
  %555 = vmatprep.subr.mxu0 0.0
  %556 = vmatpush1.msra.mxu0 0.0
  %557 = vmatprep.subr.mxu0 0.0
  %558 = vmatpush1.msra.mxu0 0.0
  %559 = vmatprep.subr.mxu0 0.0
  %560 = vmatpush1.msra.mxu0 0.0
  %561 = vmatprep.subr.mxu0 0.0
  %562 = vmatpush1.msra.mxu0 0.0
  %563 = vmatprep.subr.mxu0 0.0
  %564 = vmatpush1.msra.mxu0 0.0
  %565 = vmatprep.subr.mxu0 0.0
  %566 = vmatpush1.msra.mxu0 0.0
  %567 = vmatprep.subr.mxu0 0.0
  %568 = vmatpush1.msra.mxu0 0.0
  %569 = vmatprep.subr.mxu0 0.0
  %570 = vmatpush1.msra.mxu0 %v289
  %571 = vmatprep.subr.mxu0 0.0
  %572 = vmatpush2.msra.mxu0 0.0
  %573 = vmatprep.subr.mxu0 0.0
  %574 = vmatpush2.msra.mxu0 0.0
  %575 = vmatprep.subr.mxu0 0.0
  %576 = vmatpush2.msra.mxu0 0.0
  %577 = vmatprep.subr.mxu0 0.0
  %578 = vmatpush2.msra.mxu0 0.0
  %579 = vmatprep.subr.mxu0 0.0
  %580 = vmatpush2.msra.mxu0 0.0
  %581 = vmatprep.subr.mxu0 0.0
  %582 = vmatpush2.msra.mxu0 0.0
  %583 = vmatprep.subr.mxu0 0.0
  %584 = vmatpush2.msra.mxu0 0.0
  %585 = vmatprep.subr.mxu0 0.0
  %586 = vmatpush2.msra.mxu0 0.0
  %587 = vmatprep.subr.mxu0 0.0
  %588 = vmatpush2.msra.mxu0 0.0
  %589 = vmatprep.subr.mxu0 0.0
  %590 = vmatpush2.msra.mxu0 0.0
  %591 = vmatprep.subr.mxu0 0.0
  %592 = vmatpush2.msra.mxu0 0.0
  %593 = vmatprep.subr.mxu0 0.0
  %594 = vmatpush2.msra.mxu0 0.0
  %595 = vmatprep.subr.mxu0 0.0
  %596 = vmatpush2.msra.mxu0 0.0
  %597 = vmatprep.subr.mxu0 0.0
  %598 = vmatpush2.msra.mxu0 0.0
  %599 = vmatprep.subr.mxu0 0.0
  %600 = vmatpush2.msra.mxu0 0.0
  %601 = vmatprep.subr.mxu0 0.0
  %602 = vmatpush2.msra.mxu0 0.0
  %603 = vmatprep.mubr.f32.mxu0 0.0
  %604 = vmatmul.mubr.f32.gmra.mxu0 %v537
  %v605 = vpop.f32.mrf.mxu0
  %v606 = vadd.f32 0.0, %v605
  %v607 = vpop.f32.mrf.mxu0
  %608 = vdwg.mxu0
  %v609 = vadd.f32 %v453, %v533
  %v610 = vadd.f32 %v454, %v606
  %v611 = vrcp.pop %v461
  %v612 = vrcp.pop %v462
  %v613 = vmul.f32 %v609, %v611
  %v614 = vmul.f32 %v610, %v612
  %v615 = vld [vmem:[%s5] sm:$0xff]
  %v616 = vld [vmem:[%s5 + $0x8] sm:$0xff]
  %v617 = vld [vmem:[%s5 + $0x10] sm:$0xff]
  %v618 = vld [vmem:[%s5 + $0x18] sm:$0xff]
  %v619 = vld [vmem:[%s5 + $0x20] sm:$0xff]
  %v620 = vld [vmem:[%s5 + $0x28] sm:$0xff]
  %v621 = vld [vmem:[%s5 + $0x30] sm:$0xff]
  %v622 = vld [vmem:[%s5 + $0x38] sm:$0xff]
  %v623 = vld [vmem:[%s5 + $0x40] sm:$0xff]
  %v624 = vld [vmem:[%s5 + $0x48] sm:$0xff]
  %v625 = vld [vmem:[%s5 + $0x50] sm:$0xff]
  %v626 = vld [vmem:[%s5 + $0x58] sm:$0xff]
  %v627 = vld [vmem:[%s5 + $0x60] sm:$0xff]
  %v628 = vld [vmem:[%s5 + $0x68] sm:$0xff]
  %v629 = vld [vmem:[%s5 + $0x70] sm:$0xff]
  %v630 = vld [vmem:[%s5 + $0x78] sm:$0xff]
  %v631 = vld [vmem:[%s6] sm:$0x1]
  %v633 = vlaneseq
  %v634 = vshrl.u32 %v633, 7
  %v635 = vsub.s32 0, %v634
  %v636 = vrot.slane %v631, %v635
  %638 = vmatprep.subr.mxu0 0.0
  %639 = vmatpush1.msra.mxu0 %v630
  %640 = vmatprep.subr.mxu0 0.0
  %641 = vmatpush1.msra.mxu0 %v629
  %642 = vmatprep.subr.mxu0 0.0
  %643 = vmatpush1.msra.mxu0 %v628
  %644 = vmatprep.subr.mxu0 0.0
  %645 = vmatpush1.msra.mxu0 %v627
  %646 = vmatprep.subr.mxu0 0.0
  %647 = vmatpush1.msra.mxu0 %v626
  %648 = vmatprep.subr.mxu0 0.0
  %649 = vmatpush1.msra.mxu0 %v625
  %650 = vmatprep.subr.mxu0 0.0
  %651 = vmatpush1.msra.mxu0 %v624
  %652 = vmatprep.subr.mxu0 0.0
  %653 = vmatpush1.msra.mxu0 %v623
  %654 = vmatprep.subr.mxu0 0.0
  %655 = vmatpush1.msra.mxu0 %v622
  %656 = vmatprep.subr.mxu0 0.0
  %657 = vmatpush1.msra.mxu0 %v621
  %658 = vmatprep.subr.mxu0 0.0
  %659 = vmatpush1.msra.mxu0 %v620
  %660 = vmatprep.subr.mxu0 0.0
  %661 = vmatpush1.msra.mxu0 %v619
  %662 = vmatprep.subr.mxu0 0.0
  %663 = vmatpush1.msra.mxu0 %v618
  %664 = vmatprep.subr.mxu0 0.0
  %665 = vmatpush1.msra.mxu0 %v617
  %666 = vmatprep.subr.mxu0 0.0
  %667 = vmatpush1.msra.mxu0 %v616
  %668 = vmatprep.subr.mxu0 0.0
  %669 = vmatpush1.msra.mxu0 %v615
  %670 = vmatprep.subr.mxu0 0.0
  %671 = vmatpush2.msra.mxu0 0.0
  %672 = vmatprep.subr.mxu0 0.0
  %673 = vmatpush2.msra.mxu0 0.0
  %674 = vmatprep.subr.mxu0 0.0
  %675 = vmatpush2.msra.mxu0 0.0
  %676 = vmatprep.subr.mxu0 0.0
  %677 = vmatpush2.msra.mxu0 0.0
  %678 = vmatprep.subr.mxu0 0.0
  %679 = vmatpush2.msra.mxu0 0.0
  %680 = vmatprep.subr.mxu0 0.0
  %681 = vmatpush2.msra.mxu0 0.0
  %682 = vmatprep.subr.mxu0 0.0
  %683 = vmatpush2.msra.mxu0 0.0
  %684 = vmatprep.subr.mxu0 0.0
  %685 = vmatpush2.msra.mxu0 0.0
  %686 = vmatprep.subr.mxu0 0.0
  %687 = vmatpush2.msra.mxu0 0.0
  %688 = vmatprep.subr.mxu0 0.0
  %689 = vmatpush2.msra.mxu0 0.0
  %690 = vmatprep.subr.mxu0 0.0
  %691 = vmatpush2.msra.mxu0 0.0
  %692 = vmatprep.subr.mxu0 0.0
  %693 = vmatpush2.msra.mxu0 0.0
  %694 = vmatprep.subr.mxu0 0.0
  %695 = vmatpush2.msra.mxu0 0.0
  %696 = vmatprep.subr.mxu0 0.0
  %697 = vmatpush2.msra.mxu0 0.0
  %698 = vmatprep.subr.mxu0 0.0
  %699 = vmatpush2.msra.mxu0 0.0
  %700 = vmatprep.subr.mxu0 0.0
  %701 = vmatpush2.msra.mxu0 0.0
  %702 = vmatprep.mubr.f32.mxu0 0.0
  %703 = vmatmul.mubr.f32.gmra.mxu0 %v613
  %v704 = vpop.f32.mrf.mxu0
  %v705 = vadd.f32 %v636, %v704
  %v706 = vpop.f32.mrf.mxu0
  %707 = vmatprep.mubr.f32.mxu0 0.0
  %708 = vmatmul.mubr.f32.gmra.mxu0 %v614
  %v709 = vpop.f32.mrf.mxu0
  %v710 = vadd.f32 %v636, %v709
  %v711 = vpop.f32.mrf.mxu0
  %712 = vdwg.mxu0
  %713 = vst [vmem:[%s7] sm:$0xff] %v705
  %714 = vst [vmem:[%s7 + $0x8] sm:$0xff] %v710
  // Predicated region
  $region30: #{mhsa_forward.1} parent=0 // pred_check
    _
  $region31: #{mhsa_forward.1} parent=0 // pred_check_branch
    %716 = sbr.rel (0) target = $region33
  $region32: #{mhsa_forward.1} parent=0 // pred_region
    _
  $region33: #{mhsa_forward.1} parent=0 // pred_fallthru
    _
  // Predicated region
  $region34: #{mhsa_forward.1} parent=0 // pred_check
    _
  $region35: #{mhsa_forward.1} parent=0 // pred_check_branch
    %718 = sbr.rel (0) target = $region37
  $region36: #{mhsa_forward.1} parent=0 // pred_region
    _
  $region37: #{mhsa_forward.1} parent=0 // pred_fallthru
    _

</llo_original>
